<compile_context>
chip_gen: v5e
topology: v5e:2x2
jax: 0.10.0
libtpu: 0.0.40
codegen_flags: <defaults>
</compile_context>

<pallas_src>
import functools

import jax
import jax.numpy as jnp
from jax.experimental import pallas as pl
from jax.experimental.pallas import tpu as pltpu


def _round_up(x, m):
    return ((x + m - 1) // m) * m


def qnet_kernel(x_ref, w1_ref, b1_ref, w2_ref, b2_ref, w3_ref, b3_ref, o_ref,
                *, act_dim):
    # x already carries the (BN-folded) normalization inside w1/b1.
    h1 = jnp.dot(x_ref[...], w1_ref[...],
                 preferred_element_type=jnp.float32) + b1_ref[...]
    h1 = jnp.maximum(h1, 0.0)

    h2 = jnp.dot(h1.astype(jnp.bfloat16), w2_ref[...],
                 preferred_element_type=jnp.float32) + b2_ref[...]
    h2 = jnp.maximum(h2, 0.0)

    out = jnp.dot(h2.astype(jnp.bfloat16), w3_ref[...],
                  preferred_element_type=jnp.float32) + b3_ref[...]

    # Narrow store: only the real action columns go back to HBM.
    o_ref[...] = out[:, :act_dim]


def qnetwork_forward(state, params, *, eps=1e-5, tb_max=2048):
    """state: (B, state_size) f32 -> (B, action_size) f32.

    Matches nn.Sequential(BatchNorm1d(train-mode stats), Linear, ReLU, Linear,
    ReLU, Linear) up to bf16 matmul-input rounding.
    """
    B, S = state.shape
    H1 = params["w1"].shape[1]
    H2 = params["w2"].shape[1]
    A = params["w3"].shape[1]

    # --- BatchNorm1d training-mode statistics over the FULL (unpadded) batch,
    # computed in the wrapper and folded into the first Linear (f32 math first,
    # bf16 cast after) so kernel batch tiles stay independent. ---
    x32 = state.astype(jnp.float32)
    mean = jnp.mean(x32, axis=0, keepdims=True)
    var = jnp.mean(jnp.square(x32 - mean), axis=0, keepdims=True)   # biased
    scale = params["gamma"] * jax.lax.rsqrt(var + eps)              # (1, S)
    shift = params["beta"] - mean * scale                           # (1, S)
    w1_f = params["w1"] * scale.reshape(-1, 1)                      # (S, H1) f32
    b1_f = shift @ params["w1"] + params["b1"]                      # (1, H1) f32

    # --- Tiling: TB multiple of 16 (bf16 sublanes), capped at ~ceil(B/2) so the
    # grid has >= 2 steps whenever B >= 32 (lets v7x megacore split the batch).
    TB = max(16, min(tb_max, _round_up((B + 1) // 2, 16)))
    B_pad = _round_up(B, TB)
    grid = (B_pad // TB,)

    # bf16 x at the call boundary (half-width batch DMA); pad only if needed
    # (pad is at most TB-1 rows by construction).
    x_bf = x32.astype(jnp.bfloat16)
    if B_pad != B:
        x_bf = jnp.pad(x_bf, ((0, B_pad - B), (0, 0)))

    # bf16 weights (halves weight DMA; accumulation stays f32).  w3/b3 are kept
    # lane-padded to 128 *inside the kernel only* (MXU cost identical); the HBM
    # output is narrow (B_pad, A).
    AP = _round_up(A, 128)
    w1 = w1_f.astype(jnp.bfloat16)
    w2 = params["w2"].astype(jnp.bfloat16)
    w3_p = jnp.pad(params["w3"], ((0, 0), (0, AP - A))).astype(jnp.bfloat16)
    b3_p = jnp.pad(params["b3"], ((0, 0), (0, AP - A)))
    b1, b2 = b1_f, params["b2"]

    def tile_spec(shape):                       # batch-tiled arrays
        return pl.BlockSpec(shape, lambda i: (i, 0))

    def const_spec(shape):                      # VMEM-resident across grid steps
        return pl.BlockSpec(shape, lambda i: (0,) * len(shape))

    flops = 2 * B_pad * (S * H1 + H1 * H2 + H2 * AP)
    bytes_accessed = (x_bf.size * 2
                      + w1.size * 2 + w2.size * 2 + w3_p.size * 2
                      + (H1 + H2 + AP) * 4
                      + B_pad * A * 4)

    out = pl.pallas_call(
        functools.partial(qnet_kernel, act_dim=A),
        out_shape=jax.ShapeDtypeStruct((B_pad, A), jnp.float32),
        grid=grid,
        in_specs=[
            tile_spec((TB, S)),                           # x (bf16, batch-tiled)
            const_spec((S, H1)), const_spec((1, H1)),     # w1 / b1 (BN folded)
            const_spec((H1, H2)), const_spec((1, H2)),    # w2 / b2
            const_spec((H2, AP)), const_spec((1, AP)),    # w3 / b3 (lane-padded)
        ],
        out_specs=tile_spec((TB, A)),                     # narrow HBM output
        compiler_params=pltpu.CompilerParams(
            # Batch tiles are independent -> megacore-shardable on v7x.
            dimension_semantics=("parallel",),
        ),
        cost_estimate=pl.CostEstimate(flops=flops, transcendentals=0,
                                      bytes_accessed=bytes_accessed),
    )(x_bf, w1, b1, w2, b2, w3_p, b3_p)

    return out[:B, :]


def init_params(key, state_size, action_size, fc1_units=64, fc2_units=64):
    """Deterministic init mimicking PyTorch defaults (uniform +-1/sqrt(fan_in))."""
    def linear(k, fan_in, fan_out):
        kw, kb = jax.random.split(k)
        bound = 1.0 / jnp.sqrt(float(fan_in))
        w = jax.random.uniform(kw, (fan_in, fan_out), jnp.float32, -bound, bound)
        b = jax.random.uniform(kb, (1, fan_out), jnp.float32, -bound, bound)
        return w, b

    k1, k2, k3 = jax.random.split(key, 3)
    w1, b1 = linear(k1, state_size, fc1_units)
    w2, b2 = linear(k2, fc1_units, fc2_units)
    w3, b3 = linear(k3, fc2_units, action_size)
    return {
        "gamma": jnp.ones((1, state_size), jnp.float32),   # BatchNorm1d weight
        "beta": jnp.zeros((1, state_size), jnp.float32),   # BatchNorm1d bias
        "w1": w1, "b1": b1,
        "w2": w2, "b2": b2,
        "w3": w3, "b3": b3,
    }


def _reference_forward(state, params, eps=1e-5):
    """Pure-JAX f32 reference matching PyTorch training-mode forward."""
    x = state.astype(jnp.float32)
    mean = jnp.mean(x, axis=0, keepdims=True)
    var = jnp.mean(jnp.square(x - mean), axis=0, keepdims=True)
    xn = (x - mean) * jax.lax.rsqrt(var + eps) * params["gamma"] + params["beta"]
    h1 = jnp.maximum(xn @ params["w1"] + params["b1"], 0.0)
    h2 = jnp.maximum(h1 @ params["w2"] + params["b2"], 0.0)
    return h2 @ params["w3"] + params["b3"]


if __name__ == "__main__":
    state_size, action_size = 16, 4
    batch = 8

    key = jax.random.PRNGKey(0)
    k_params, k_state = jax.random.split(key)

    params = init_params(k_params, state_size, action_size)
    state = jax.random.normal(k_state, (batch, state_size), jnp.float32)

    out = qnetwork_forward(state, params)
    jax.block_until_ready(out)

    assert out.shape == (batch, action_size)
    assert out.dtype == jnp.float32

    # Sanity-check against the f32 reference (loose tol: bf16 MXU inputs).
    ref = _reference_forward(state, params)
    assert jnp.allclose(out, ref, rtol=5e-2, atol=1e-1), (
        f"max abs err {float(jnp.max(jnp.abs(out - ref)))}")

    print("KERNEL_OK")
</pallas_src>

<mosaic_0001>
module attributes {stable_mosaic.version = 11 : i64} {
  func.func @qnet_kernel(%arg0: i32, %arg1: memref<16x16xbf16, #tpu.memory_space<vmem>>, %arg2: memref<16x64xbf16, #tpu.memory_space<vmem>>, %arg3: memref<1x64xf32, #tpu.memory_space<vmem>>, %arg4: memref<64x64xbf16, #tpu.memory_space<vmem>>, %arg5: memref<1x64xf32, #tpu.memory_space<vmem>>, %arg6: memref<64x128xbf16, #tpu.memory_space<vmem>>, %arg7: memref<1x128xf32, #tpu.memory_space<vmem>>, %arg8: memref<16x4xf32, #tpu.memory_space<vmem>>) attributes {dimension_semantics = [#tpu.dimension_semantics<parallel>], iteration_bounds = array<i64: 1>, scalar_prefetch = 0 : i64, scratch_operands = 0 : i64, tpu.core_type = #tpu.core_type<tc>, window_params = [{transform_indices = @transform_0, window_bounds = array<i64: 16, 16>}, {pipeline_mode = #tpu.pipeline_mode<synchronous>, transform_indices = @transform_1, window_bounds = array<i64: 16, 64>}, {pipeline_mode = #tpu.pipeline_mode<synchronous>, transform_indices = @transform_2, window_bounds = array<i64: 1, 64>}, {pipeline_mode = #tpu.pipeline_mode<synchronous>, transform_indices = @transform_3, window_bounds = array<i64: 64, 64>}, {pipeline_mode = #tpu.pipeline_mode<synchronous>, transform_indices = @transform_4, window_bounds = array<i64: 1, 64>}, {pipeline_mode = #tpu.pipeline_mode<synchronous>, transform_indices = @transform_5, window_bounds = array<i64: 64, 128>}, {pipeline_mode = #tpu.pipeline_mode<synchronous>, transform_indices = @transform_6, window_bounds = array<i64: 1, 128>}, {transform_indices = @transform_7, window_bounds = array<i64: 16, 4>}]} {
    %c0 = arith.constant 0 : index
    %c0_0 = arith.constant 0 : index
    %0 = vector.load %arg1[%c0, %c0_0] : memref<16x16xbf16, #tpu.memory_space<vmem>>, vector<16x16xbf16>
    %c0_1 = arith.constant 0 : index
    %c0_2 = arith.constant 0 : index
    %1 = vector.load %arg2[%c0_1, %c0_2] : memref<16x64xbf16, #tpu.memory_space<vmem>>, vector<16x64xbf16>
    %cst = arith.constant dense<0.000000e+00> : vector<16x64xf32>
    %2 = tpu.matmul %0, %1, %cst {dimension_numbers = #tpu.dot_dimension_numbers<[1], [0], [0], [1], [0, 0, 1, 1], [], []>} : vector<16x16xbf16>, vector<16x64xbf16>, vector<16x64xf32> -> vector<16x64xf32>
    %c0_3 = arith.constant 0 : index
    %c0_4 = arith.constant 0 : index
    %3 = vector.load %arg3[%c0_3, %c0_4] : memref<1x64xf32, #tpu.memory_space<vmem>>, vector<1x64xf32>
    %4 = vector.broadcast %3 : vector<1x64xf32> to vector<16x64xf32>
    %5 = arith.addf %2, %4 : vector<16x64xf32>
    %cst_5 = arith.constant 0.000000e+00 : f32
    %6 = vector.broadcast %cst_5 : f32 to vector<16x64xf32>
    %7 = arith.maximumf %5, %6 : vector<16x64xf32>
    %8 = arith.truncf %7 : vector<16x64xf32> to vector<16x64xbf16>
    %c0_6 = arith.constant 0 : index
    %c0_7 = arith.constant 0 : index
    %9 = vector.load %arg4[%c0_6, %c0_7] : memref<64x64xbf16, #tpu.memory_space<vmem>>, vector<64x64xbf16>
    %cst_8 = arith.constant dense<0.000000e+00> : vector<16x64xf32>
    %10 = tpu.matmul %8, %9, %cst_8 {dimension_numbers = #tpu.dot_dimension_numbers<[1], [0], [0], [1], [0, 0, 1, 1], [], []>} : vector<16x64xbf16>, vector<64x64xbf16>, vector<16x64xf32> -> vector<16x64xf32>
    %c0_9 = arith.constant 0 : index
    %c0_10 = arith.constant 0 : index
    %11 = vector.load %arg5[%c0_9, %c0_10] : memref<1x64xf32, #tpu.memory_space<vmem>>, vector<1x64xf32>
    %12 = vector.broadcast %11 : vector<1x64xf32> to vector<16x64xf32>
    %13 = arith.addf %10, %12 : vector<16x64xf32>
    %cst_11 = arith.constant 0.000000e+00 : f32
    %14 = vector.broadcast %cst_11 : f32 to vector<16x64xf32>
    %15 = arith.maximumf %13, %14 : vector<16x64xf32>
    %16 = arith.truncf %15 : vector<16x64xf32> to vector<16x64xbf16>
    %c0_12 = arith.constant 0 : index
    %c0_13 = arith.constant 0 : index
    %17 = vector.load %arg6[%c0_12, %c0_13] : memref<64x128xbf16, #tpu.memory_space<vmem>>, vector<64x128xbf16>
    %cst_14 = arith.constant dense<0.000000e+00> : vector<16x128xf32>
    %18 = tpu.matmul %16, %17, %cst_14 {dimension_numbers = #tpu.dot_dimension_numbers<[1], [0], [0], [1], [0, 0, 1, 1], [], []>} : vector<16x64xbf16>, vector<64x128xbf16>, vector<16x128xf32> -> vector<16x128xf32>
    %c0_15 = arith.constant 0 : index
    %c0_16 = arith.constant 0 : index
    %19 = vector.load %arg7[%c0_15, %c0_16] : memref<1x128xf32, #tpu.memory_space<vmem>>, vector<1x128xf32>
    %20 = vector.broadcast %19 : vector<1x128xf32> to vector<16x128xf32>
    %21 = arith.addf %18, %20 : vector<16x128xf32>
    %22 = vector.extract_strided_slice %21 {offsets = [0, 0], sizes = [16, 4], strides = [1, 1]} : vector<16x128xf32> to vector<16x4xf32>
    %c0_17 = arith.constant 0 : index
    %c0_18 = arith.constant 0 : index
    %23 = vector.load %arg8[%c0_17, %c0_18] : memref<16x4xf32, #tpu.memory_space<vmem>>, vector<16x4xf32>
    tpu.vector_store %arg8[%c0_17, %c0_18], %22 {strides = array<i32>} : memref<16x4xf32, #tpu.memory_space<vmem>>, vector<16x4xf32>,
    return
  }
  func.func @transform_0(%arg0: i32) -> (i32, i32) {
    %c0_i32 = arith.constant 0 : i32
    %c0_i32_0 = arith.constant 0 : i32
    return %arg0, %c0_i32 : i32, i32
  }
  func.func @transform_1(%arg0: i32) -> (i32, i32) {
    %c0_i32 = arith.constant 0 : i32
    %c0_i32_0 = arith.constant 0 : i32
    %c0_i32_1 = arith.constant 0 : i32
    return %c0_i32, %c0_i32_0 : i32, i32
  }
  func.func @transform_2(%arg0: i32) -> (i32, i32) {
    %c0_i32 = arith.constant 0 : i32
    %c0_i32_0 = arith.constant 0 : i32
    %c0_i32_1 = arith.constant 0 : i32
    return %c0_i32, %c0_i32_0 : i32, i32
  }
  func.func @transform_3(%arg0: i32) -> (i32, i32) {
    %c0_i32 = arith.constant 0 : i32
    %c0_i32_0 = arith.constant 0 : i32
    %c0_i32_1 = arith.constant 0 : i32
    return %c0_i32, %c0_i32_0 : i32, i32
  }
  func.func @transform_4(%arg0: i32) -> (i32, i32) {
    %c0_i32 = arith.constant 0 : i32
    %c0_i32_0 = arith.constant 0 : i32
    %c0_i32_1 = arith.constant 0 : i32
    return %c0_i32, %c0_i32_0 : i32, i32
  }
  func.func @transform_5(%arg0: i32) -> (i32, i32) {
    %c0_i32 = arith.constant 0 : i32
    %c0_i32_0 = arith.constant 0 : i32
    %c0_i32_1 = arith.constant 0 : i32
    return %c0_i32, %c0_i32_0 : i32, i32
  }
  func.func @transform_6(%arg0: i32) -> (i32, i32) {
    %c0_i32 = arith.constant 0 : i32
    %c0_i32_0 = arith.constant 0 : i32
    %c0_i32_1 = arith.constant 0 : i32
    return %c0_i32, %c0_i32_0 : i32, i32
  }
  func.func @transform_7(%arg0: i32) -> (i32, i32) {
    %c0_i32 = arith.constant 0 : i32
    %c0_i32_0 = arith.constant 0 : i32
    return %arg0, %c0_i32 : i32, i32
  }
}

</mosaic_0001>

<llo_original>
// kernel: tpu_custom_call.1
$region0: #{tpu_custom_call.1}
  #allocation0 [shape = 'u32[]', space=smem, size = 0x4, offset = 0x4, fixed_abs, tag = 'smem constant byte address 0x4 - core index']
  #allocation1 [shape = 'u32[72,128]{1,0:T(1,128)}', space=vmem, size = 0x9000, scoped, tag = 'internal scratch']
  %s0 = inlined_call_operand.hbm [shape: bf16[16,16], index: 0, kind: input, shape index: {}]
  %s1 = inlined_call_operand.hbm [shape: bf16[16,64], index: 1, kind: input, shape index: {}]
  %s2 = inlined_call_operand.vmem [shape: f32[1,64], index: 2, kind: input, shape index: {}]
  %s3 = inlined_call_operand.hbm [shape: bf16[64,64], index: 3, kind: input, shape index: {}]
  %s4 = inlined_call_operand.vmem [shape: f32[1,64], index: 4, kind: input, shape index: {}]
  %s5 = inlined_call_operand.hbm [shape: bf16[64,128], index: 5, kind: input, shape index: {}]
  %s6 = inlined_call_operand.vmem [shape: f32[1,128], index: 6, kind: input, shape index: {}]
  %s7 = inlined_call_operand.vmem [shape: f32[16,4], index: 7, kind: output, shape index: {}]
  %s8 = sld [smem:[#allocation0]]
  $region54: #{tpu_custom_call.1} parent=0
    _
  %s10 = ssub.s32 1, %s8
  %s11 = scalar_select 0, %s10, %s8
  $region1: #{tpu_custom_call.1} parent=0
    #allocation2 [shape = 'u8[4096]{0}', space=vmem, size = 0x1000, scoped, tag = 'input window, operand 0, single buffered']
    #allocation3 [shape = 's32[1]{0}', space=sflag, size = 0x4, scoped, tag = 'scoped memory for tpu_custom_call.1']
    #allocation4 [shape = 'u8[4096]{0}', space=vmem, size = 0x1000, scoped, tag = 'input window, operand 1, single buffered']
    #allocation5 [shape = 's32[1]{0}', space=sflag, size = 0x4, scoped, tag = 'scoped memory for tpu_custom_call.1']
    #allocation6 [shape = 'u8[16384]{0}', space=vmem, size = 0x4000, scoped, tag = 'input window, operand 3, single buffered']
    #allocation7 [shape = 'u8[16384]{0}', space=vmem, size = 0x4000, scoped, tag = 'input window, operand 5, single buffered']
    #allocation8 [shape = 's32[1]{0}', space=sflag, size = 0x4, scoped, tag = 'scoped memory for tpu_custom_call.1']
    %12 = vsyncpa [#allocation3], 0
    %13 = vsyncpa [#allocation5], 0
    %14 = vsyncpa [#allocation8], 0
    // Predicated region
    $region2: #{tpu_custom_call.1} parent=1 // pred_check
      _
    $region3: #{tpu_custom_call.1} parent=1 // pred_check_branch
      %16 = sbr.rel (0) target = $region5
    $region4: #{tpu_custom_call.1} parent=1 // pred_region
      %18 = vsyncadd [#allocation3], 0
      %s19 = sshll.u32 %s0, 4
      %s20 = int_to_ptr.hbm [resolvable:$true] %s19
      %s21 = sshll.u32 [#allocation2], 4
      %s22 = int_to_ptr.vmem [resolvable:$true] %s21
      %27 = dma.hbm_to_vmem [thread:$0]  %s20, 128, %s22, [#allocation3], 64, 64, 4
    $region5: #{tpu_custom_call.1} parent=1 // pred_fallthru
      _
    // Predicated region
    $region6: #{tpu_custom_call.1} parent=1 // pred_check
      _
    $region7: #{tpu_custom_call.1} parent=1 // pred_check_branch
      %29 = sbr.rel (0) target = $region9
    $region8: #{tpu_custom_call.1} parent=1 // pred_region
      %31 = vsyncadd [#allocation5], 0
      %s32 = sshll.u32 %s1, 4
      %s33 = int_to_ptr.hbm [resolvable:$true] %s32
      %s34 = sshll.u32 [#allocation4], 4
      %s35 = int_to_ptr.vmem [resolvable:$true] %s34
      %40 = dma.hbm_to_vmem [thread:$0]  %s33, 128, %s35, [#allocation5], 64, 64, 4
    $region9: #{tpu_custom_call.1} parent=1 // pred_fallthru
      _
    // Predicated region
    $region10: #{tpu_custom_call.1} parent=1 // pred_check
      _
    $region11: #{tpu_custom_call.1} parent=1 // pred_check_branch
      %42 = sbr.rel (0) target = $region13
    $region12: #{tpu_custom_call.1} parent=1 // pred_region
      _
    $region13: #{tpu_custom_call.1} parent=1 // pred_fallthru
      _
    // Predicated region
    $region14: #{tpu_custom_call.1} parent=1 // pred_check
      _
    $region15: #{tpu_custom_call.1} parent=1 // pred_check_branch
      %44 = sbr.rel (0) target = $region17
    $region16: #{tpu_custom_call.1} parent=1 // pred_region
      %46 = vsyncadd [#allocation5], 0
      %s47 = sshll.u32 %s3, 4
      %s48 = int_to_ptr.hbm [resolvable:$true] %s47
      %s49 = sshll.u32 [#allocation6], 4
      %s50 = int_to_ptr.vmem [resolvable:$true] %s49
      %55 = dma.hbm_to_vmem [thread:$0]  %s48, 512, %s50, [#allocation5], 64, 64, 4
    $region17: #{tpu_custom_call.1} parent=1 // pred_fallthru
      _
    // Predicated region
    $region18: #{tpu_custom_call.1} parent=1 // pred_check
      _
    $region19: #{tpu_custom_call.1} parent=1 // pred_check_branch
      %57 = sbr.rel (0) target = $region21
    $region20: #{tpu_custom_call.1} parent=1 // pred_region
      _
    $region21: #{tpu_custom_call.1} parent=1 // pred_fallthru
      _
    // Predicated region
    $region22: #{tpu_custom_call.1} parent=1 // pred_check
      _
    $region23: #{tpu_custom_call.1} parent=1 // pred_check_branch
      %59 = sbr.rel (0) target = $region25
    $region24: #{tpu_custom_call.1} parent=1 // pred_region
      %61 = vsyncadd [#allocation8], 0
      %s62 = sshll.u32 %s5, 4
      %s63 = int_to_ptr.hbm [resolvable:$true] %s62
      %s64 = sshll.u32 [#allocation7], 4
      %s65 = int_to_ptr.vmem [resolvable:$true] %s64
      %70 = dma.hbm_to_vmem [thread:$0]  %s63, 512, %s65, [#allocation8], 64, 64, 4
    $region25: #{tpu_custom_call.1} parent=1 // pred_fallthru
      _
    // Predicated region
    $region26: #{tpu_custom_call.1} parent=1 // pred_check
      _
    $region27: #{tpu_custom_call.1} parent=1 // pred_check_branch
      %72 = sbr.rel (0) target = $region29
    $region28: #{tpu_custom_call.1} parent=1 // pred_region
      _
    $region29: #{tpu_custom_call.1} parent=1 // pred_fallthru
      _
    // Predicated region
    $region30: #{tpu_custom_call.1} parent=1 // pred_check
      _
    $region31: #{tpu_custom_call.1} parent=1 // pred_check_branch
      %74 = sbr.rel (0) target = $region33
    $region32: #{tpu_custom_call.1} parent=1 // pred_region
      %76 = dma.done [#allocation3], 128
    $region33: #{tpu_custom_call.1} parent=1 // pred_fallthru
      _
    // Predicated region
    $region34: #{tpu_custom_call.1} parent=1 // pred_check
      _
    $region35: #{tpu_custom_call.1} parent=1 // pred_check_branch
      %78 = sbr.rel (0) target = $region37
    $region36: #{tpu_custom_call.1} parent=1 // pred_region
      %80 = dma.done [#allocation5], 128
    $region37: #{tpu_custom_call.1} parent=1 // pred_fallthru
      _
    // Predicated region
    $region38: #{tpu_custom_call.1} parent=1 // pred_check
      _
    $region39: #{tpu_custom_call.1} parent=1 // pred_check_branch
      %82 = sbr.rel (0) target = $region41
    $region40: #{tpu_custom_call.1} parent=1 // pred_region
      %84 = dma.done [#allocation5], 512
    $region41: #{tpu_custom_call.1} parent=1 // pred_fallthru
      _
    // Predicated region
    $region42: #{tpu_custom_call.1} parent=1 // pred_check
      _
    $region43: #{tpu_custom_call.1} parent=1 // pred_check_branch
      %86 = sbr.rel (0) target = $region45
    $region44: #{tpu_custom_call.1} parent=1 // pred_region
      %88 = dma.done [#allocation8], 512
    $region45: #{tpu_custom_call.1} parent=1 // pred_fallthru
      _
    %v90 = vld [vmem:[#allocation2] sm:$0xf]
    %v91 = vld [vmem:[#allocation2 + $0x4] sm:$0xf]
    %v92 = vld [vmem:[#allocation4] sm:$0xf]
    %v93 = vld [vmem:[#allocation4 + $0x4] sm:$0xf]
    %v94 = vld [vmem:[%s2] sm:$0x1]
    %v96 = vperm.slane %v94, 0
    %v100 = vunpack.c.l.b16 %v90
    %v101 = vunpack.c.l.b16 %v91
    %v102 = vpack.c.b16 %v101, %v100
    %v105 = vunpack.c.l.b16 %v92
    %v106 = vunpack.c.l.b16 %v93
    %v107 = vpack.c.b16 %v106, %v105
    %vm109 = vcmask 130048
    %v111 = vsel %vm109, %v102, 0
    %113 = vmatpush.bf16.msra.mxu0 0
    %114 = vmatpush.bf16.msra.mxu0 0
    %115 = vmatpush.bf16.msra.mxu0 0
    %116 = vmatpush.bf16.msra.mxu0 0
    %117 = vmatpush.bf16.msra.mxu0 0
    %118 = vmatpush.bf16.msra.mxu0 0
    %119 = vmatpush.bf16.msra.mxu0 0
    %120 = vmatpush.bf16.msra.mxu0 %v107
    %121 = vmatmul.bf16.gmra.mxu0 %v111
    %v122 = vpop.f32.mrf.mxu0
    %v123 = vadd.f32 %v96, %v122
    %v124 = vpop.f32.mrf.mxu0
    %v125 = vadd.f32 %v96, %v124
    %126 = vdwg.mxu0
    %v127 = vmax.f32 %v123, 0.0
    %v128 = vmax.f32 %v125, 0.0
    %v129 = vpack.c.bf16 %v128, %v127
    %v130 = vld [vmem:[#allocation6] sm:$0xf]
    %v131 = vld [vmem:[#allocation6 + $0x4] sm:$0xf]
    %v132 = vld [vmem:[#allocation6 + $0x8] sm:$0xf]
    %v133 = vld [vmem:[#allocation6 + $0xc] sm:$0xf]
    %v134 = vld [vmem:[#allocation6 + $0x10] sm:$0xf]
    %v135 = vld [vmem:[#allocation6 + $0x14] sm:$0xf]
    %v136 = vld [vmem:[#allocation6 + $0x18] sm:$0xf]
    %v137 = vld [vmem:[#allocation6 + $0x1c] sm:$0xf]
    %v138 = vld [vmem:[%s4] sm:$0x1]
    %v140 = vperm.slane %v138, 0
    %v150 = vunpack.c.l.b16 %v130
    %v151 = vunpack.c.l.b16 %v131
    %v152 = vunpack.c.l.b16 %v132
    %v153 = vunpack.c.l.b16 %v133
    %v154 = vunpack.c.l.b16 %v134
    %v155 = vunpack.c.l.b16 %v135
    %v156 = vunpack.c.l.b16 %v136
    %v157 = vunpack.c.l.b16 %v137
    %v158 = vpack.c.b16 %v151, %v150
    %v159 = vpack.c.b16 %v153, %v152
    %v160 = vpack.c.b16 %v155, %v154
    %v161 = vpack.c.b16 %v157, %v156
    %vm166 = vcmask 523264
    %v168 = vsel %vm166, %v129, 0
    %170 = vmatpush.bf16.msra.mxu0 0
    %171 = vmatpush.bf16.msra.mxu0 0
    %172 = vmatpush.bf16.msra.mxu0 0
    %173 = vmatpush.bf16.msra.mxu0 0
    %174 = vmatpush.bf16.msra.mxu0 %v161
    %175 = vmatpush.bf16.msra.mxu0 %v160
    %176 = vmatpush.bf16.msra.mxu0 %v159
    %177 = vmatpush.bf16.msra.mxu0 %v158
    %178 = vmatmul.bf16.gmra.mxu0 %v168
    %v179 = vpop.f32.mrf.mxu0
    %v180 = vadd.f32 %v140, %v179
    %v181 = vpop.f32.mrf.mxu0
    %v182 = vadd.f32 %v140, %v181
    %183 = vdwg.mxu0
    %v184 = vmax.f32 %v180, 0.0
    %v185 = vmax.f32 %v182, 0.0
    %v186 = vpack.c.bf16 %v185, %v184
    %v187 = vld [vmem:[#allocation7] sm:$0xf]
    %v188 = vld [vmem:[#allocation7 + $0x4] sm:$0xf]
    %v189 = vld [vmem:[#allocation7 + $0x8] sm:$0xf]
    %v190 = vld [vmem:[#allocation7 + $0xc] sm:$0xf]
    %v191 = vld [vmem:[#allocation7 + $0x10] sm:$0xf]
    %v192 = vld [vmem:[#allocation7 + $0x14] sm:$0xf]
    %v193 = vld [vmem:[#allocation7 + $0x18] sm:$0xf]
    %v194 = vld [vmem:[#allocation7 + $0x1c] sm:$0xf]
    %v195 = vld [vmem:[%s6] sm:$0x1]
    %v197 = vperm.slane %v195, 0
    %v207 = vunpack.c.l.b16 %v187
    %v208 = vunpack.c.l.b16 %v188
    %v209 = vunpack.c.l.b16 %v189
    %v210 = vunpack.c.l.b16 %v190
    %v211 = vunpack.c.l.b16 %v191
    %v212 = vunpack.c.l.b16 %v192
    %v213 = vunpack.c.l.b16 %v193
    %v214 = vunpack.c.l.b16 %v194
    %v215 = vpack.c.b16 %v208, %v207
    %v216 = vpack.c.b16 %v210, %v209
    %v217 = vpack.c.b16 %v212, %v211
    %v218 = vpack.c.b16 %v214, %v213
    %v224 = vsel %vm166, %v186, 0
    %226 = vmatpush.bf16.msra.mxu0 0
    %227 = vmatpush.bf16.msra.mxu0 0
    %228 = vmatpush.bf16.msra.mxu0 0
    %229 = vmatpush.bf16.msra.mxu0 0
    %230 = vmatpush.bf16.msra.mxu0 %v218
    %231 = vmatpush.bf16.msra.mxu0 %v217
    %232 = vmatpush.bf16.msra.mxu0 %v216
    %233 = vmatpush.bf16.msra.mxu0 %v215
    %234 = vmatmul.bf16.gmra.mxu0 %v224
    %v235 = vpop.f32.mrf.mxu0
    %v236 = vadd.f32 %v197, %v235
    %v237 = vpop.f32.mrf.mxu0
    %v238 = vadd.f32 %v197, %v237
    %239 = vdwg.mxu0
    %vm240 = vcmask 31744
    %241 = vst.msk [vmem:[%s7] sm:$0xff] %vm240, %v236
    %242 = vst.msk [vmem:[%s7 + $0x8] sm:$0xff] %vm240, %v238
    // Predicated region
    $region46: #{tpu_custom_call.1} parent=1 // pred_check
      _
    $region47: #{tpu_custom_call.1} parent=1 // pred_check_branch
      %244 = sbr.rel (0) target = $region49
    $region48: #{tpu_custom_call.1} parent=1 // pred_region
      _
    $region49: #{tpu_custom_call.1} parent=1 // pred_fallthru
      _
    // Predicated region
    $region50: #{tpu_custom_call.1} parent=1 // pred_check
      _
    $region51: #{tpu_custom_call.1} parent=1 // pred_check_branch
      %246 = sbr.rel (0) target = $region53
    $region52: #{tpu_custom_call.1} parent=1 // pred_region
      _
    $region53: #{tpu_custom_call.1} parent=1 // pred_fallthru
      _
    %247 = vsyncpa [#allocation3], 1
    %248 = vsyncpa [#allocation5], 1
    %249 = vsyncpa [#allocation8], 1

</llo_original>
